<compile_context>
chip_gen: v5e
topology: v5e:2x2
jax: 0.10.0
libtpu: 0.0.40
codegen_flags: <defaults>
</compile_context>

<pallas_src>
import functools

import jax
import jax.numpy as jnp
from jax.experimental import pallas as pl
from jax.experimental.pallas import tpu as pltpu

NEG_SLOPE = 0.01  # nn.LeakyReLU default (module never forwards its 0.1 argument)


def _mlp_kernel(x_ref, w1_ref, w2_ref, w3t_ref, o_ref):
    """One pixel tile, channels-first: (3, TM) -> (3, TM) through the 3-layer MLP.

    Layers 1 and 3 run on the VPU/XLU (their contraction / output widths of 3 would
    waste >95% of the MXU); layer 2 (32x32) runs on the MXU with bf16 operands and
    f32 accumulation.  LeakyReLU runs in f32 (v5e-safe).
    """
    x = x_ref[0].astype(jnp.float32)        # (3, TM)
    w1 = w1_ref[...]                        # (32, 3)  f32, column k = input channel k
    w3t = w3t_ref[...]                      # (32, 3)  f32, column o = output channel o

    # ---- layer 1 (3 -> 32) on the VPU: 3 broadcast-mul-adds, exact f32 ----
    h = (w1[:, 0:1] * x[0:1, :]
         + w1[:, 1:2] * x[1:2, :]
         + w1[:, 2:3] * x[2:3, :])          # (32, TM) f32
    h = jnp.maximum(h, NEG_SLOPE * h)       # LeakyReLU (slope < 1 => max form)

    # ---- layer 2 (32 -> 32) on the MXU: bf16 in, f32 accumulate ----
    h = jnp.dot(w2_ref[...], h.astype(jnp.bfloat16),
                preferred_element_type=jnp.float32)   # (32, TM) f32
    h = jnp.maximum(h, NEG_SLOPE * h)

    # ---- layer 3 (32 -> 3) on VPU + XLU sublane reduction ----
    y = jnp.concatenate(
        [jnp.sum(w3t[:, o:o + 1] * h, axis=0, keepdims=True) for o in range(3)],
        axis=0)                             # (3, TM) f32
    o_ref[0] = y.astype(o_ref.dtype)


def _run_mlp(x3, w1, w2, w3, *, tm=32768):
    """x3: (N, 3, M) channels-first pixel matrix.  Weights in PyTorch (out, in) layout."""
    N, C, M = x3.shape

    # Lane-aligned tile; if M is not a multiple of the tile the last grid block is
    # partial (columns are independent, OOB output lanes are dropped by Pallas), so
    # no wrapper-side pad/slice HBM passes are needed.
    tm_eff = min(tm, pl.cdiv(M, 128) * 128)
    num_tiles = pl.cdiv(M, tm_eff)

    # Tiny one-time weight prep (resident in VMEM for the whole grid).
    w1f = w1.astype(jnp.float32)            # (32, 3)
    w2b = w2.astype(jnp.bfloat16)           # (32, 32) -> MXU fast path
    w3t = w3.T.astype(jnp.float32)          # (32, 3)  column-sliceable in-kernel

    return pl.pallas_call(
        _mlp_kernel,
        out_shape=jax.ShapeDtypeStruct((N, C, M), x3.dtype),
        grid_spec=pltpu.PrefetchScalarGridSpec(
            num_scalar_prefetch=0,
            # Pixel-tile axis leads: clean 2-way megacore split on v7x even for N=1-3.
            grid=(num_tiles, N),
            in_specs=[
                pl.BlockSpec((1, C, tm_eff), lambda i, n: (n, 0, i)),  # lane-dense pixel tile
                pl.BlockSpec(w1f.shape, lambda i, n: (0, 0)),          # (32, 3)  resident
                pl.BlockSpec(w2b.shape, lambda i, n: (0, 0)),          # (32, 32) resident
                pl.BlockSpec(w3t.shape, lambda i, n: (0, 0)),          # (32, 3)  resident
            ],
            out_specs=pl.BlockSpec((1, C, tm_eff), lambda i, n: (n, 0, i)),
        ),
        compiler_params=pltpu.CompilerParams(
            dimension_semantics=("parallel", "parallel"),
            # TM=32768 needs more than the 16/32 MiB default scoped limits; 64 MiB is
            # still <= v7x physical VMEM and far under v5e/v6e's 128 MiB.
            vmem_limit_bytes=64 * 1024 * 1024,
        ),
        cost_estimate=pl.CostEstimate(
            flops=2 * (3 * 32 + 32 * 32 + 32 * 3) * N * M,
            transcendentals=0,
            bytes_accessed=2 * N * C * M * 4,  # f32 in + out; weights negligible
        ),
    )(x3, w1f, w2b, w3t)


def init_color_transform_params(key, dtype=jnp.float32):
    """Deterministic synthetic params in PyTorch nn.Linear layout: weight is (out, in)."""
    def linear_w(k, fan_in, fan_out):
        bound = float(fan_in) ** -0.5  # kaiming-uniform-ish, deterministic
        return jax.random.uniform(k, (fan_out, fan_in), dtype, -bound, bound)

    ks = jax.random.split(key, 6)
    fwd = (linear_w(ks[0], 3, 32), linear_w(ks[1], 32, 32), linear_w(ks[2], 32, 3))
    rev = (linear_w(ks[3], 3, 32), linear_w(ks[4], 32, 32), linear_w(ks[5], 32, 3))
    return {"net": fwd, "rev_net": rev}


@functools.partial(jax.jit, static_argnames=("inv", "freeze"))
def color_transform(x, params, inv: bool = False, freeze: bool = False):
    """Forward pass of ColorTransform.  x: (N, 3, H, W) NCHW -> (N, 3, H, W).

    NCHW is already channels-first, exactly the kernel's layout, so only a free
    reshape to (N, 3, H*W) and back is needed (no transposes).  `freeze` only affects
    autograd in PyTorch; the forward math is identical, so it is a no-op here.
    """
    w1, w2, w3 = params["rev_net"] if inv else params["net"]
    N, C, H, W = x.shape
    x3 = x.reshape(N, C, H * W)
    y3 = _run_mlp(x3, w1, w2, w3)
    return y3.reshape(N, C, H, W)


def _reference(x, params, inv=False):
    """Pure-JAX f32 reference (PyTorch semantics: Linear over the channel dim)."""
    w1, w2, w3 = params["rev_net"] if inv else params["net"]
    xh = jnp.transpose(x, (0, 2, 3, 1)).astype(jnp.float32)   # NHWC
    h = xh @ w1.T
    h = jnp.where(h > 0, h, NEG_SLOPE * h)
    h = h @ w2.T
    h = jnp.where(h > 0, h, NEG_SLOPE * h)
    y = h @ w3.T
    return jnp.transpose(y, (0, 3, 1, 2))


if __name__ == "__main__":
    key = jax.random.PRNGKey(0)
    pkey, xkey = jax.random.split(key)

    params = init_color_transform_params(pkey)
    x = jax.random.normal(xkey, (2, 3, 16, 16), dtype=jnp.float32)  # NCHW, C=3

    y_fwd = color_transform(x, params, inv=False)
    y_inv = color_transform(x, params, inv=True)
    jax.block_until_ready((y_fwd, y_inv))

    ref_fwd = _reference(x, params, inv=False)
    ref_inv = _reference(x, params, inv=True)

    assert y_fwd.shape == x.shape and y_inv.shape == x.shape
    # Only layer 2 uses bf16 operands (f32 accumulation); layers 1 and 3 are exact
    # f32, so the tolerance is comfortably generous.
    assert jnp.allclose(y_fwd, ref_fwd, atol=3e-2, rtol=3e-2)
    assert jnp.allclose(y_inv, ref_inv, atol=3e-2, rtol=3e-2)

    print("KERNEL_OK")
</pallas_src>

<mosaic_0001>
module attributes {stable_mosaic.version = 11 : i64} {
  func.func @_mlp_kernel(%arg0: i32, %arg1: i32, %arg2: memref<1x3x256xf32, #tpu.memory_space<vmem>>, %arg3: memref<32x3xf32, #tpu.memory_space<vmem>>, %arg4: memref<32x32xbf16, #tpu.memory_space<vmem>>, %arg5: memref<32x3xf32, #tpu.memory_space<vmem>>, %arg6: memref<1x3x256xf32, #tpu.memory_space<vmem>>) attributes {dimension_semantics = [#tpu.dimension_semantics<parallel>, #tpu.dimension_semantics<parallel>], iteration_bounds = array<i64: 1, 2>, scalar_prefetch = 0 : i64, scratch_operands = 0 : i64, tpu.core_type = #tpu.core_type<tc>, window_params = [{transform_indices = @transform_0, window_bounds = array<i64: 1, 3, 256>}, {pipeline_mode = #tpu.pipeline_mode<synchronous>, transform_indices = @transform_1, window_bounds = array<i64: 32, 3>}, {pipeline_mode = #tpu.pipeline_mode<synchronous>, transform_indices = @transform_2, window_bounds = array<i64: 32, 32>}, {pipeline_mode = #tpu.pipeline_mode<synchronous>, transform_indices = @transform_3, window_bounds = array<i64: 32, 3>}, {transform_indices = @transform_4, window_bounds = array<i64: 1, 3, 256>}]} {
    %c0 = arith.constant 0 : index
    %c0_0 = arith.constant 0 : index
    %c0_1 = arith.constant 0 : index
    %0 = vector.load %arg2[%c0, %c0_0, %c0_1] : memref<1x3x256xf32, #tpu.memory_space<vmem>>, vector<1x3x256xf32>
    %1 = vector.shape_cast %0 : vector<1x3x256xf32> to vector<3x256xf32>
    %c0_2 = arith.constant 0 : index
    %c0_3 = arith.constant 0 : index
    %2 = vector.load %arg3[%c0_2, %c0_3] : memref<32x3xf32, #tpu.memory_space<vmem>>, vector<32x3xf32>
    %c0_4 = arith.constant 0 : index
    %c0_5 = arith.constant 0 : index
    %3 = vector.load %arg5[%c0_4, %c0_5] : memref<32x3xf32, #tpu.memory_space<vmem>>, vector<32x3xf32>
    %4 = vector.extract_strided_slice %2 {offsets = [0, 0], sizes = [32, 1], strides = [1, 1]} : vector<32x3xf32> to vector<32x1xf32>
    %5 = vector.extract_strided_slice %1 {offsets = [0, 0], sizes = [1, 256], strides = [1, 1]} : vector<3x256xf32> to vector<1x256xf32>
    %6 = vector.broadcast %4 : vector<32x1xf32> to vector<32x256xf32>
    %7 = vector.broadcast %5 : vector<1x256xf32> to vector<32x256xf32>
    %8 = arith.mulf %6, %7 : vector<32x256xf32>
    %9 = vector.extract_strided_slice %2 {offsets = [0, 1], sizes = [32, 1], strides = [1, 1]} : vector<32x3xf32> to vector<32x1xf32>
    %10 = vector.extract_strided_slice %1 {offsets = [1, 0], sizes = [1, 256], strides = [1, 1]} : vector<3x256xf32> to vector<1x256xf32>
    %11 = vector.broadcast %9 : vector<32x1xf32> to vector<32x256xf32>
    %12 = vector.broadcast %10 : vector<1x256xf32> to vector<32x256xf32>
    %13 = arith.mulf %11, %12 : vector<32x256xf32>
    %14 = arith.addf %8, %13 : vector<32x256xf32>
    %15 = vector.extract_strided_slice %2 {offsets = [0, 2], sizes = [32, 1], strides = [1, 1]} : vector<32x3xf32> to vector<32x1xf32>
    %16 = vector.extract_strided_slice %1 {offsets = [2, 0], sizes = [1, 256], strides = [1, 1]} : vector<3x256xf32> to vector<1x256xf32>
    %17 = vector.broadcast %15 : vector<32x1xf32> to vector<32x256xf32>
    %18 = vector.broadcast %16 : vector<1x256xf32> to vector<32x256xf32>
    %19 = arith.mulf %17, %18 : vector<32x256xf32>
    %20 = arith.addf %14, %19 : vector<32x256xf32>
    %cst = arith.constant 0.00999999977 : f32
    %21 = vector.broadcast %cst : f32 to vector<32x256xf32>
    %22 = arith.mulf %21, %20 : vector<32x256xf32>
    %23 = arith.maximumf %20, %22 : vector<32x256xf32>
    %c0_6 = arith.constant 0 : index
    %c0_7 = arith.constant 0 : index
    %24 = vector.load %arg4[%c0_6, %c0_7] : memref<32x32xbf16, #tpu.memory_space<vmem>>, vector<32x32xbf16>
    %25 = arith.truncf %23 : vector<32x256xf32> to vector<32x256xbf16>
    %cst_8 = arith.constant dense<0.000000e+00> : vector<32x256xf32>
    %26 = tpu.matmul %24, %25, %cst_8 {dimension_numbers = #tpu.dot_dimension_numbers<[1], [0], [0], [1], [0, 0, 1, 1], [], []>} : vector<32x32xbf16>, vector<32x256xbf16>, vector<32x256xf32> -> vector<32x256xf32>
    %cst_9 = arith.constant 0.00999999977 : f32
    %27 = vector.broadcast %cst_9 : f32 to vector<32x256xf32>
    %28 = arith.mulf %27, %26 : vector<32x256xf32>
    %29 = arith.maximumf %26, %28 : vector<32x256xf32>
    %30 = vector.extract_strided_slice %3 {offsets = [0, 0], sizes = [32, 1], strides = [1, 1]} : vector<32x3xf32> to vector<32x1xf32>
    %31 = vector.broadcast %30 : vector<32x1xf32> to vector<32x256xf32>
    %32 = arith.mulf %31, %29 : vector<32x256xf32>
    %cst_10 = arith.constant dense<0.000000e+00> : vector<256xf32>
    %33 = vector.multi_reduction <add>, %32, %cst_10 [0] : vector<32x256xf32> to vector<256xf32>
    %34 = vector.shape_cast %33 : vector<256xf32> to vector<1x256xf32>
    %35 = vector.extract_strided_slice %3 {offsets = [0, 1], sizes = [32, 1], strides = [1, 1]} : vector<32x3xf32> to vector<32x1xf32>
    %36 = vector.broadcast %35 : vector<32x1xf32> to vector<32x256xf32>
    %37 = arith.mulf %36, %29 : vector<32x256xf32>
    %cst_11 = arith.constant dense<0.000000e+00> : vector<256xf32>
    %38 = vector.multi_reduction <add>, %37, %cst_11 [0] : vector<32x256xf32> to vector<256xf32>
    %39 = vector.shape_cast %38 : vector<256xf32> to vector<1x256xf32>
    %40 = vector.extract_strided_slice %3 {offsets = [0, 2], sizes = [32, 1], strides = [1, 1]} : vector<32x3xf32> to vector<32x1xf32>
    %41 = vector.broadcast %40 : vector<32x1xf32> to vector<32x256xf32>
    %42 = arith.mulf %41, %29 : vector<32x256xf32>
    %cst_12 = arith.constant dense<0.000000e+00> : vector<256xf32>
    %43 = vector.multi_reduction <add>, %42, %cst_12 [0] : vector<32x256xf32> to vector<256xf32>
    %44 = vector.shape_cast %43 : vector<256xf32> to vector<1x256xf32>
    %45 = tpu.concatenate %34, %39, %44 in 0 : vector<1x256xf32>, vector<1x256xf32>, vector<1x256xf32> -> vector<3x256xf32>
    %c0_13 = arith.constant 0 : index
    %c0_14 = arith.constant 0 : index
    %c0_15 = arith.constant 0 : index
    %46 = vector.load %arg6[%c0_13, %c0_14, %c0_15] : memref<1x3x256xf32, #tpu.memory_space<vmem>>, vector<1x3x256xf32>
    %47 = vector.shape_cast %46 : vector<1x3x256xf32> to vector<3x256xf32>
    %48 = vector.shape_cast %45 : vector<3x256xf32> to vector<1x3x256xf32>
    tpu.vector_store %arg6[%c0_13, %c0_14, %c0_15], %48 {strides = array<i32>} : memref<1x3x256xf32, #tpu.memory_space<vmem>>, vector<1x3x256xf32>,
    return
  }
  func.func @transform_0(%arg0: i32, %arg1: i32) -> (i32, i32, i32) {
    %c0_i32 = arith.constant 0 : i32
    %c0_i32_0 = arith.constant 0 : i32
    return %arg1, %c0_i32, %arg0 : i32, i32, i32
  }
  func.func @transform_1(%arg0: i32, %arg1: i32) -> (i32, i32) {
    %c0_i32 = arith.constant 0 : i32
    %c0_i32_0 = arith.constant 0 : i32
    %c0_i32_1 = arith.constant 0 : i32
    return %c0_i32, %c0_i32_0 : i32, i32
  }
  func.func @transform_2(%arg0: i32, %arg1: i32) -> (i32, i32) {
    %c0_i32 = arith.constant 0 : i32
    %c0_i32_0 = arith.constant 0 : i32
    %c0_i32_1 = arith.constant 0 : i32
    return %c0_i32, %c0_i32_0 : i32, i32
  }
  func.func @transform_3(%arg0: i32, %arg1: i32) -> (i32, i32) {
    %c0_i32 = arith.constant 0 : i32
    %c0_i32_0 = arith.constant 0 : i32
    %c0_i32_1 = arith.constant 0 : i32
    return %c0_i32, %c0_i32_0 : i32, i32
  }
  func.func @transform_4(%arg0: i32, %arg1: i32) -> (i32, i32, i32) {
    %c0_i32 = arith.constant 0 : i32
    %c0_i32_0 = arith.constant 0 : i32
    return %arg1, %c0_i32, %arg0 : i32, i32, i32
  }
}

</mosaic_0001>

<llo_original>
// kernel: color_transform.1
$region0: #{color_transform.1}
  #allocation0 [shape = 'u32[]', space=smem, size = 0x4, offset = 0x4, fixed_abs, tag = 'smem constant byte address 0x4 - core index']
  #allocation1 [shape = 'u32[72,128]{1,0:T(1,128)}', space=vmem, size = 0x9000, scoped, tag = 'internal scratch']
  %s0 = inlined_call_operand.vmem [shape: f32[2,3,256], index: 0, kind: input, shape index: {}]
  %s1 = inlined_call_operand.vmem [shape: f32[32,3], index: 1, kind: input, shape index: {}]
  %s2 = inlined_call_operand.vmem [shape: bf16[32,32], index: 2, kind: input, shape index: {}]
  %s3 = inlined_call_operand.vmem [shape: f32[32,3], index: 3, kind: input, shape index: {}]
  %s4 = inlined_call_operand.vmem [shape: f32[2,3,256], index: 4, kind: output, shape index: {}]
  %s5 = sld [smem:[#allocation0]]
  $region49: #{color_transform.1} parent=0
    _
  %s7 = ssub.s32 1, %s5
  %s8 = scalar_select 0, %s7, %s5
  loop: start=0, step=1, limit=4
  $region2: #{color_transform.1} parent=0 // loop_pre_header
    _
  $region3: #{color_transform.1} parent=0 // loop_header
    %s10 = sphi 0, %s14
    %p11 = scmp.ge.s32.totalorder %s10, 4
    %s17 = sphi 0, %s29
    %s18 = sphi 0, %s25
    %s19 = sphi 0, %s17
    %s20 = sphi 0, %s18
    %s21 = sphi 0, %s19
    %s22 = sphi 0, %s20
    %s34 = sphi 0, %s36
    %s37 = sphi 0, %s34
    %s38 = sphi 0, %s37
    %s54 = sphi 0, %s38
    %s58 = sphi 0, %s58
    %s60 = sphi 0, %s58
    %s61 = sphi 0, %s60
    %s75 = sphi 0, %s61
    %s79 = sphi 0, %s79
    %s81 = sphi 0, %s79
    %s82 = sphi 0, %s81
    %s96 = sphi 0, %s82
    %s100 = sphi 0, %s100
    %s102 = sphi 0, %s100
    %s103 = sphi 0, %s102
    %s117 = sphi 0, %s103
    %s125 = sphi 0, %s127
    %s128 = sphi 0, %s125
    %s129 = sphi 0, %s128
    %s145 = sphi 0, %s129
  $region4: #{color_transform.1} parent=0 // loop_header_branch
    %13 = sbr.rel (%p11) target = $region8
  $region5: #{color_transform.1} parent=0 // loop_body
    %s15 = ssub.s32 %s10, 1
    %s16 = ssub.s32 %s10, 2
    %s23 = sadd.s32 1, %s18
    %p24 = scmp.ge.s32.totalorder %s23, 2
    %s25 = scalar_select %p24, 0, %s23
    %s26 = sadd.s32 1, %s17
    %s27 = scalar_select %p24, %s26, %s17
    %p28 = scmp.ge.s32.totalorder %s27, 1
    %s29 = scalar_select %p28, 0, %s27
    %s30 = ssub.s32 %s18, %s25
    %s31 = ssub.s32 %s17, %s29
    %s32 = sor.u32 %s30, %s31
    %p33 = scmp.eq.s32.totalorder %s32, 0
    %s35 = sadd.s32 %s34, 1
    %s36 = scalar_select %p33, %s34, %s35
    %p39 = pneg %p33
    %p40 = scmp.eq.s32.totalorder %s10, 1
    %p41 = por %p39, %p40
    %p42 = scmp.ne.s32.totalorder %s34, %s37
    %p43 = scmp.eq.s32.totalorder %s10, 0
    %p44 = por %p42, %p43
    %p45 = scmp.ne.s32.totalorder %s34, %s37
    %p46 = scmp.eq.s32.totalorder %s15, 1
    %p47 = por %p45, %p46
    %p48 = scmp.ne.s32.totalorder %s37, %s38
    %p49 = scmp.eq.s32.totalorder %s15, 0
    %p50 = por %p48, %p49
    %p51 = scmp.ne.s32.totalorder %s37, %s38
    %p52 = scmp.eq.s32.totalorder %s16, 1
    %p53 = por %p51, %p52
    %p55 = scmp.ne.s32.totalorder %s38, %s54
    %p56 = scmp.eq.s32.totalorder %s16, 0
    %p57 = por %p55, %p56
    %s59 = sadd.s32 %s58, 1
    %p62 = scmp.eq.s32.totalorder %s10, 1
    %p63 = scmp.ne.s32.totalorder %s58, %s60
    %p64 = scmp.eq.s32.totalorder %s10, 0
    %p65 = por %p63, %p64
    %p66 = scmp.ne.s32.totalorder %s58, %s60
    %p67 = scmp.eq.s32.totalorder %s15, 1
    %p68 = por %p66, %p67
    %p69 = scmp.ne.s32.totalorder %s60, %s61
    %p70 = scmp.eq.s32.totalorder %s15, 0
    %p71 = por %p69, %p70
    %p72 = scmp.ne.s32.totalorder %s60, %s61
    %p73 = scmp.eq.s32.totalorder %s16, 1
    %p74 = por %p72, %p73
    %p76 = scmp.ne.s32.totalorder %s61, %s75
    %p77 = scmp.eq.s32.totalorder %s16, 0
    %p78 = por %p76, %p77
    %s80 = sadd.s32 %s79, 1
    %p83 = scmp.eq.s32.totalorder %s10, 1
    %p84 = scmp.ne.s32.totalorder %s79, %s81
    %p85 = scmp.eq.s32.totalorder %s10, 0
    %p86 = por %p84, %p85
    %p87 = scmp.ne.s32.totalorder %s79, %s81
    %p88 = scmp.eq.s32.totalorder %s15, 1
    %p89 = por %p87, %p88
    %p90 = scmp.ne.s32.totalorder %s81, %s82
    %p91 = scmp.eq.s32.totalorder %s15, 0
    %p92 = por %p90, %p91
    %p93 = scmp.ne.s32.totalorder %s81, %s82
    %p94 = scmp.eq.s32.totalorder %s16, 1
    %p95 = por %p93, %p94
    %p97 = scmp.ne.s32.totalorder %s82, %s96
    %p98 = scmp.eq.s32.totalorder %s16, 0
    %p99 = por %p97, %p98
    %s101 = sadd.s32 %s100, 1
    %p104 = scmp.eq.s32.totalorder %s10, 1
    %p105 = scmp.ne.s32.totalorder %s100, %s102
    %p106 = scmp.eq.s32.totalorder %s10, 0
    %p107 = por %p105, %p106
    %p108 = scmp.ne.s32.totalorder %s100, %s102
    %p109 = scmp.eq.s32.totalorder %s15, 1
    %p110 = por %p108, %p109
    %p111 = scmp.ne.s32.totalorder %s102, %s103
    %p112 = scmp.eq.s32.totalorder %s15, 0
    %p113 = por %p111, %p112
    %p114 = scmp.ne.s32.totalorder %s102, %s103
    %p115 = scmp.eq.s32.totalorder %s16, 1
    %p116 = por %p114, %p115
    %p118 = scmp.ne.s32.totalorder %s103, %s117
    %p119 = scmp.eq.s32.totalorder %s16, 0
    %p120 = por %p118, %p119
    %s121 = ssub.s32 %s18, %s25
    %s122 = ssub.s32 %s17, %s29
    %s123 = sor.u32 %s121, %s122
    %p124 = scmp.eq.s32.totalorder %s123, 0
    %s126 = sadd.s32 %s125, 1
    %s127 = scalar_select %p124, %s125, %s126
    %p130 = pneg %p124
    %p131 = scmp.eq.s32.totalorder %s10, 1
    %p132 = por %p130, %p131
    %p133 = scmp.ne.s32.totalorder %s125, %s128
    %p134 = scmp.eq.s32.totalorder %s10, 0
    %p135 = por %p133, %p134
    %p136 = scmp.ne.s32.totalorder %s125, %s128
    %p137 = scmp.eq.s32.totalorder %s15, 1
    %p138 = por %p136, %p137
    %p139 = scmp.ne.s32.totalorder %s128, %s129
    %p140 = scmp.eq.s32.totalorder %s15, 0
    %p141 = por %p139, %p140
    %p142 = scmp.ne.s32.totalorder %s128, %s129
    %p143 = scmp.eq.s32.totalorder %s16, 1
    %p144 = por %p142, %p143
    %p146 = scmp.ne.s32.totalorder %s129, %s145
    %p147 = scmp.eq.s32.totalorder %s16, 0
    %p148 = por %p146, %p147
    %p149 = scmp.le.s32.totalorder 1, %s10
    %p150 = scmp.lt.s32.totalorder %s10, 3
    %p151 = pnand %p149, %p150
    %p152 = pneg %p151
    // Predicated region
    $region9: #{color_transform.1} parent=5 // pred_check
      _
    $region10: #{color_transform.1} parent=5 // pred_check_branch
      %154 = sbr.rel (%p151) target = $region12
    $region11: #{color_transform.1} parent=5 // pred_region
      %s155 = ssub.s32 %s10, 1
      // Predicated region
      $region13: #{color_transform.1} parent=11 // pred_check
        %p156 = pneg %p71
      $region14: #{color_transform.1} parent=11 // pred_check_branch
        %158 = sbr.rel (%p156) target = $region16
      $region15: #{color_transform.1} parent=11 // pred_region
        _
      $region16: #{color_transform.1} parent=11 // pred_fallthru
        _
      // Predicated region
      $region17: #{color_transform.1} parent=11 // pred_check
        %p159 = pneg %p92
      $region18: #{color_transform.1} parent=11 // pred_check_branch
        %161 = sbr.rel (%p159) target = $region20
      $region19: #{color_transform.1} parent=11 // pred_region
        _
      $region20: #{color_transform.1} parent=11 // pred_fallthru
        _
      // Predicated region
      $region21: #{color_transform.1} parent=11 // pred_check
        %p162 = pneg %p113
      $region22: #{color_transform.1} parent=11 // pred_check_branch
        %164 = sbr.rel (%p162) target = $region24
      $region23: #{color_transform.1} parent=11 // pred_region
        _
      $region24: #{color_transform.1} parent=11 // pred_fallthru
        _
    $region12: #{color_transform.1} parent=5 // pred_fallthru
      _
    %p165 = scmp.lt.s32.totalorder %s10, 2
    // Predicated region
    $region25: #{color_transform.1} parent=5 // pred_check
      %p166 = pneg %p165
    $region26: #{color_transform.1} parent=5 // pred_check_branch
      %168 = sbr.rel (%p166) target = $region28
    $region27: #{color_transform.1} parent=5 // pred_region
      // Predicated region
      $region29: #{color_transform.1} parent=27 // pred_check
        %p169 = pneg %p44
      $region30: #{color_transform.1} parent=27 // pred_check_branch
        %171 = sbr.rel (%p169) target = $region32
      $region31: #{color_transform.1} parent=27 // pred_region
        %s172 = smul.u32 2, %s17
        %p173 = scmp.lt.s32.totalorder %s18, 1
        %s174 = scalar_select %p173, %s18, 1
        %p175 = scmp.lt.s32.totalorder %s172, 1
        %s176 = scalar_select %p175, %s172, 1
        %s177 = smul.addr %s174, 2
        %s178 = sadd.s32 %s176, %s177
        %s179 = smul.addr %s178, 4
        %s180 = scalar_lea.vmem %s0, %s179
        %s181 = smul.u32 2, %s17
      $region32: #{color_transform.1} parent=27 // pred_fallthru
        _
    $region28: #{color_transform.1} parent=5 // pred_fallthru
      _
    %p182 = scmp.le.s32.totalorder 1, %s10
    %p183 = scmp.lt.s32.totalorder %s10, 3
    %p184 = pnand %p182, %p183
    %p185 = pneg %p184
    // Predicated region
    $region33: #{color_transform.1} parent=5 // pred_check
      _
    $region34: #{color_transform.1} parent=5 // pred_check_branch
      %187 = sbr.rel (%p184) target = $region36
    $region35: #{color_transform.1} parent=5 // pred_region
      %s188 = ssub.s32 %s10, 1
      %s189 = smul.u32 2, %s19
      %p190 = scmp.lt.s32.totalorder %s20, 1
      %s191 = scalar_select %p190, %s20, 1
      %p192 = scmp.lt.s32.totalorder %s189, 1
      %s193 = scalar_select %p192, %s189, 1
      %s194 = smul.addr %s191, 2
      %s195 = sadd.s32 %s193, %s194
      %s196 = smul.addr %s195, 4
      %s197 = scalar_lea.vmem %s0, %s196
      %p198 = pneg %p50
      %p199 = pneg %p47
      %p200 = pneg %p71
      %p201 = pneg %p68
      %p202 = pneg %p92
      %p203 = pneg %p89
      %p204 = pneg %p113
      %p205 = pneg %p110
      %p206 = pneg %p141
      %p207 = pneg %p138
      %s208 = smul.u32 2, %s19
      %p209 = scmp.lt.s32.totalorder %s20, 1
      %s210 = scalar_select %p209, %s20, 1
      %p211 = scmp.lt.s32.totalorder %s208, 1
      %s212 = scalar_select %p211, %s208, 1
      %s213 = smul.addr %s210, 2
      %s214 = sadd.s32 %s212, %s213
      %s215 = smul.addr %s214, 4
      %s216 = scalar_lea.vmem %s4, %s215
      %s217 = smul.u32 2, %s19
      %p218 = scmp.lt.s32.totalorder %s20, 1
      %s219 = scalar_select %p218, %s20, 1
      %p220 = scmp.lt.s32.totalorder %s217, 1
      %s221 = scalar_select %p220, %s217, 1
      %s222 = smul.addr %s219, 2
      %s223 = sadd.s32 %s221, %s222
      %s224 = smul.addr %s223, 4
      %s225 = scalar_lea.vmem %s0, %s224
      %s226 = smul.u32 2, %s19
      %s227 = smul.u32 2, %s19
      %p228 = scmp.lt.s32.totalorder %s20, 1
      %s229 = scalar_select %p228, %s20, 1
      %p230 = scmp.lt.s32.totalorder %s227, 1
      %s231 = scalar_select %p230, %s227, 1
      %s232 = smul.addr %s229, 2
      %s233 = sadd.s32 %s231, %s232
      %s234 = smul.addr %s233, 4
      %s235 = scalar_lea.vmem %s4, %s234
      %s236 = smul.u32 2, %s19
      %v238 = vld [vmem:[%s225] sm:$0x77]
      %v239 = vld [vmem:[%s1] sm:$0xff]
      %v240 = vld [vmem:[%s1 + $0x8] sm:$0xff]
      %v241 = vld [vmem:[%s1 + $0x10] sm:$0xff]
      %v242 = vld [vmem:[%s1 + $0x18] sm:$0xff]
      %v243 = vld [vmem:[%s3] sm:$0xff]
      %v244 = vld [vmem:[%s3 + $0x8] sm:$0xff]
      %v245 = vld [vmem:[%s3 + $0x10] sm:$0xff]
      %v246 = vld [vmem:[%s3 + $0x18] sm:$0xff]
      %248 = vset.pattern.permute.xlu0 0
      %249 = vperm.xlu0 %248, %v239
      %v250 = vpop.permute.xlu0 %249
      %253 = vset.pattern.permute.xlu0 0
      %254 = vperm.xlu0 %253, %v240
      %v255 = vpop.permute.xlu0 %254
      %258 = vset.pattern.permute.xlu0 0
      %259 = vperm.xlu0 %258, %v241
      %v260 = vpop.permute.xlu0 %259
      %263 = vset.pattern.permute.xlu0 0
      %264 = vperm.xlu0 %263, %v242
      %v265 = vpop.permute.xlu0 %264
      %v268 = vperm.slane %v238, 0
      %v269 = vperm.slane %v238, 4
      %v272 = vperm.slane %v268, 0
      %v273 = vperm.slane %v269, 0
      %v274 = vmul.f32 %v250, %v272
      %v275 = vmul.f32 %v250, %v273
      %v276 = vmul.f32 %v255, %v272
      %v277 = vmul.f32 %v255, %v273
      %v278 = vmul.f32 %v260, %v272
      %v279 = vmul.f32 %v260, %v273
      %v280 = vmul.f32 %v265, %v272
      %v281 = vmul.f32 %v265, %v273
      %282 = vset.pattern.permute.xlu0 1
      %283 = vperm.xlu0 %282, %v239
      %v284 = vpop.permute.xlu0 %283
      %286 = vset.pattern.permute.xlu0 1
      %287 = vperm.xlu0 %286, %v240
      %v288 = vpop.permute.xlu0 %287
      %290 = vset.pattern.permute.xlu0 1
      %291 = vperm.xlu0 %290, %v241
      %v292 = vpop.permute.xlu0 %291
      %294 = vset.pattern.permute.xlu0 1
      %295 = vperm.xlu0 %294, %v242
      %v296 = vpop.permute.xlu0 %295
      %v298 = vperm.slane %v238, 1
      %v299 = vperm.slane %v238, 5
      %v302 = vperm.slane %v298, 1
      %v303 = vperm.slane %v299, 1
      %v304 = vmul.f32 %v284, %v302
      %v305 = vmul.f32 %v284, %v303
      %v306 = vmul.f32 %v288, %v302
      %v307 = vmul.f32 %v288, %v303
      %v308 = vmul.f32 %v292, %v302
      %v309 = vmul.f32 %v292, %v303
      %v310 = vmul.f32 %v296, %v302
      %v311 = vmul.f32 %v296, %v303
      %v312 = vadd.f32 %v274, %v304
      %v313 = vadd.f32 %v275, %v305
      %v314 = vadd.f32 %v276, %v306
      %v315 = vadd.f32 %v277, %v307
      %v316 = vadd.f32 %v278, %v308
      %v317 = vadd.f32 %v279, %v309
      %v318 = vadd.f32 %v280, %v310
      %v319 = vadd.f32 %v281, %v311
      %320 = vset.pattern.permute.xlu0 2
      %321 = vperm.xlu0 %320, %v239
      %v322 = vpop.permute.xlu0 %321
      %324 = vset.pattern.permute.xlu0 2
      %325 = vperm.xlu0 %324, %v240
      %v326 = vpop.permute.xlu0 %325
      %328 = vset.pattern.permute.xlu0 2
      %329 = vperm.xlu0 %328, %v241
      %v330 = vpop.permute.xlu0 %329
      %332 = vset.pattern.permute.xlu0 2
      %333 = vperm.xlu0 %332, %v242
      %v334 = vpop.permute.xlu0 %333
      %v336 = vperm.slane %v238, 2
      %v337 = vperm.slane %v238, 6
      %v340 = vperm.slane %v336, 2
      %v341 = vperm.slane %v337, 2
      %v342 = vmul.f32 %v322, %v340
      %v343 = vmul.f32 %v322, %v341
      %v344 = vmul.f32 %v326, %v340
      %v345 = vmul.f32 %v326, %v341
      %v346 = vmul.f32 %v330, %v340
      %v347 = vmul.f32 %v330, %v341
      %v348 = vmul.f32 %v334, %v340
      %v349 = vmul.f32 %v334, %v341
      %v350 = vadd.f32 %v312, %v342
      %v351 = vadd.f32 %v313, %v343
      %v352 = vadd.f32 %v314, %v344
      %v353 = vadd.f32 %v315, %v345
      %v354 = vadd.f32 %v316, %v346
      %v355 = vadd.f32 %v317, %v347
      %v356 = vadd.f32 %v318, %v348
      %v357 = vadd.f32 %v319, %v349
      %v358 = vmul.f32 %v350, 0.01
      %v359 = vmul.f32 %v351, 0.01
      %v360 = vmul.f32 %v352, 0.01
      %v361 = vmul.f32 %v353, 0.01
      %v362 = vmul.f32 %v354, 0.01
      %v363 = vmul.f32 %v355, 0.01
      %v364 = vmul.f32 %v356, 0.01
      %v365 = vmul.f32 %v357, 0.01
      %v366 = vmax.f32 %v350, %v358
      %v367 = vmax.f32 %v351, %v359
      %v368 = vmax.f32 %v352, %v360
      %v369 = vmax.f32 %v353, %v361
      %v370 = vmax.f32 %v354, %v362
      %v371 = vmax.f32 %v355, %v363
      %v372 = vmax.f32 %v356, %v364
      %v373 = vmax.f32 %v357, %v365
      %v374 = vld [vmem:[%s2] sm:$0xf]
      %v375 = vld [vmem:[%s2 + $0x4] sm:$0xf]
      %v376 = vld [vmem:[%s2 + $0x8] sm:$0xf]
      %v377 = vld [vmem:[%s2 + $0xc] sm:$0xf]
      %v378 = vpack.c.bf16 %v368, %v366
      %v379 = vpack.c.bf16 %v369, %v367
      %v380 = vpack.c.bf16 %v372, %v370
      %v381 = vpack.c.bf16 %v373, %v371
      %v386 = vunpack.c.l.b16 %v374
      %v387 = vunpack.c.l.b16 %v375
      %v388 = vunpack.c.l.b16 %v376
      %v389 = vunpack.c.l.b16 %v377
      %v390 = vpack.c.b16 %v387, %v386
      %v391 = vpack.c.b16 %v389, %v388
      %vm392 = vcmask 261120
      %v394 = vsel %vm392, %v390, 0
      %v397 = vsel %vm392, %v391, 0
      %399 = vmatpush.bf16.msra.mxu0 0
      %400 = vmatpush.bf16.msra.mxu0 0
      %401 = vmatpush.bf16.msra.mxu0 0
      %402 = vmatpush.bf16.msra.mxu0 0
      %403 = vmatpush.bf16.msra.mxu0 0
      %404 = vmatpush.bf16.msra.mxu0 0
      %405 = vmatpush.bf16.msra.mxu0 %v380
      %406 = vmatpush.bf16.msra.mxu0 %v378
      %407 = vmatmul.bf16.gmra.mxu0 %v394
      %v408 = vpop.f32.mrf.mxu0
      %v409 = vadd.f32 0.0, %v408
      %v410 = vpop.f32.mrf.mxu0
      %v411 = vadd.f32 0.0, %v410
      %412 = vmatmul.bf16.gmra.mxu0 %v397
      %v413 = vpop.f32.mrf.mxu0
      %v414 = vadd.f32 0.0, %v413
      %v415 = vpop.f32.mrf.mxu0
      %v416 = vadd.f32 0.0, %v415
      %417 = vdwg.mxu0
      %418 = vmatpush.bf16.msra.mxu0 0
      %419 = vmatpush.bf16.msra.mxu0 0
      %420 = vmatpush.bf16.msra.mxu0 0
      %421 = vmatpush.bf16.msra.mxu0 0
      %422 = vmatpush.bf16.msra.mxu0 0
      %423 = vmatpush.bf16.msra.mxu0 0
      %424 = vmatpush.bf16.msra.mxu0 %v381
      %425 = vmatpush.bf16.msra.mxu0 %v379
      %426 = vmatmul.bf16.gmra.mxu0 %v394
      %v427 = vpop.f32.mrf.mxu0
      %v428 = vadd.f32 0.0, %v427
      %v429 = vpop.f32.mrf.mxu0
      %v430 = vadd.f32 0.0, %v429
      %431 = vmatmul.bf16.gmra.mxu0 %v397
      %v432 = vpop.f32.mrf.mxu0
      %v433 = vadd.f32 0.0, %v432
      %v434 = vpop.f32.mrf.mxu0
      %v435 = vadd.f32 0.0, %v434
      %436 = vdwg.mxu0
      %v437 = vmul.f32 %v409, 0.01
      %v438 = vmul.f32 %v428, 0.01
      %v439 = vmul.f32 %v411, 0.01
      %v440 = vmul.f32 %v430, 0.01
      %v441 = vmul.f32 %v414, 0.01
      %v442 = vmul.f32 %v433, 0.01
      %v443 = vmul.f32 %v416, 0.01
      %v444 = vmul.f32 %v435, 0.01
      %v445 = vmax.f32 %v409, %v437
      %v446 = vmax.f32 %v428, %v438
      %v447 = vmax.f32 %v411, %v439
      %v448 = vmax.f32 %v430, %v440
      %v449 = vmax.f32 %v414, %v441
      %v450 = vmax.f32 %v433, %v442
      %v451 = vmax.f32 %v416, %v443
      %v452 = vmax.f32 %v435, %v444
      %454 = vset.pattern.permute.xlu0 0
      %455 = vperm.xlu0 %454, %v243
      %v456 = vpop.permute.xlu0 %455
      %459 = vset.pattern.permute.xlu0 0
      %460 = vperm.xlu0 %459, %v244
      %v461 = vpop.permute.xlu0 %460
      %464 = vset.pattern.permute.xlu0 0
      %465 = vperm.xlu0 %464, %v245
      %v466 = vpop.permute.xlu0 %465
      %469 = vset.pattern.permute.xlu0 0
      %470 = vperm.xlu0 %469, %v246
      %v471 = vpop.permute.xlu0 %470
      %v473 = vmul.f32 %v456, %v445
      %v474 = vmul.f32 %v456, %v446
      %v475 = vmul.f32 %v461, %v447
      %v476 = vmul.f32 %v461, %v448
      %v477 = vmul.f32 %v466, %v449
      %v478 = vmul.f32 %v466, %v450
      %v479 = vmul.f32 %v471, %v451
      %v480 = vmul.f32 %v471, %v452
      %v481 = vadd.f32 %v473, %v475
      %v482 = vadd.f32 %v481, %v477
      %v483 = vadd.f32 %v482, %v479
      %v484 = vrot.slane %v483, 4
      %v485 = vadd.f32 %v483, %v484
      %v486 = vrot.slane %v485, 2
      %v487 = vadd.f32 %v485, %v486
      %v488 = vrot.slane %v487, 1
      %v489 = vadd.f32 %v487, %v488
      %v490 = vadd.f32 %v474, %v476
      %v491 = vadd.f32 %v490, %v478
      %v492 = vadd.f32 %v491, %v480
      %v493 = vrot.slane %v492, 4
      %v494 = vadd.f32 %v492, %v493
      %v495 = vrot.slane %v494, 2
      %v496 = vadd.f32 %v494, %v495
      %v497 = vrot.slane %v496, 1
      %v498 = vadd.f32 %v496, %v497
      %499 = vset.pattern.permute.xlu0 1
      %500 = vperm.xlu0 %499, %v243
      %v501 = vpop.permute.xlu0 %500
      %503 = vset.pattern.permute.xlu0 1
      %504 = vperm.xlu0 %503, %v244
      %v505 = vpop.permute.xlu0 %504
      %507 = vset.pattern.permute.xlu0 1
      %508 = vperm.xlu0 %507, %v245
      %v509 = vpop.permute.xlu0 %508
      %511 = vset.pattern.permute.xlu0 1
      %512 = vperm.xlu0 %511, %v246
      %v513 = vpop.permute.xlu0 %512
      %v515 = vmul.f32 %v501, %v445
      %v516 = vmul.f32 %v501, %v446
      %v517 = vmul.f32 %v505, %v447
      %v518 = vmul.f32 %v505, %v448
      %v519 = vmul.f32 %v509, %v449
      %v520 = vmul.f32 %v509, %v450
      %v521 = vmul.f32 %v513, %v451
      %v522 = vmul.f32 %v513, %v452
      %v523 = vadd.f32 %v515, %v517
      %v524 = vadd.f32 %v523, %v519
      %v525 = vadd.f32 %v524, %v521
      %v526 = vrot.slane %v525, 4
      %v527 = vadd.f32 %v525, %v526
      %v528 = vrot.slane %v527, 2
      %v529 = vadd.f32 %v527, %v528
      %v530 = vrot.slane %v529, 1
      %v531 = vadd.f32 %v529, %v530
      %v532 = vadd.f32 %v516, %v518
      %v533 = vadd.f32 %v532, %v520
      %v534 = vadd.f32 %v533, %v522
      %v535 = vrot.slane %v534, 4
      %v536 = vadd.f32 %v534, %v535
      %v537 = vrot.slane %v536, 2
      %v538 = vadd.f32 %v536, %v537
      %v539 = vrot.slane %v538, 1
      %v540 = vadd.f32 %v538, %v539
      %541 = vset.pattern.permute.xlu0 2
      %542 = vperm.xlu0 %541, %v243
      %v543 = vpop.permute.xlu0 %542
      %545 = vset.pattern.permute.xlu0 2
      %546 = vperm.xlu0 %545, %v244
      %v547 = vpop.permute.xlu0 %546
      %549 = vset.pattern.permute.xlu0 2
      %550 = vperm.xlu0 %549, %v245
      %v551 = vpop.permute.xlu0 %550
      %553 = vset.pattern.permute.xlu0 2
      %554 = vperm.xlu0 %553, %v246
      %v555 = vpop.permute.xlu0 %554
      %v557 = vmul.f32 %v543, %v445
      %v558 = vmul.f32 %v543, %v446
      %v559 = vmul.f32 %v547, %v447
      %v560 = vmul.f32 %v547, %v448
      %v561 = vmul.f32 %v551, %v449
      %v562 = vmul.f32 %v551, %v450
      %v563 = vmul.f32 %v555, %v451
      %v564 = vmul.f32 %v555, %v452
      %v565 = vadd.f32 %v557, %v559
      %v566 = vadd.f32 %v565, %v561
      %v567 = vadd.f32 %v566, %v563
      %v568 = vrot.slane %v567, 4
      %v569 = vadd.f32 %v567, %v568
      %v570 = vrot.slane %v569, 2
      %v571 = vadd.f32 %v569, %v570
      %v572 = vrot.slane %v571, 1
      %v573 = vadd.f32 %v571, %v572
      %v574 = vadd.f32 %v558, %v560
      %v575 = vadd.f32 %v574, %v562
      %v576 = vadd.f32 %v575, %v564
      %v577 = vrot.slane %v576, 4
      %v578 = vadd.f32 %v576, %v577
      %v579 = vrot.slane %v578, 2
      %v580 = vadd.f32 %v578, %v579
      %v581 = vrot.slane %v580, 1
      %v582 = vadd.f32 %v580, %v581
      %vm583 = vcmask 1040384
      %v584 = vsel %vm583, %v489, %v531
      %v585 = vsel %vm583, %v498, %v540
      %vm586 = vcmask 1041408
      %v587 = vsel %vm586, %v584, %v573
      %v588 = vsel %vm586, %v585, %v582
      %v591 = vrot.slane %v588, 4
      %vm592 = vcmask 1043456
      %v593 = vsel %vm592, %v587, %v591
      %595 = vst [vmem:[%s235] sm:$0x77] %v593
      %s596 = smul.u32 2, %s19
      %p597 = scmp.lt.s32.totalorder %s20, 1
      %s598 = scalar_select %p597, %s20, 1
      %p599 = scmp.lt.s32.totalorder %s596, 1
      %s600 = scalar_select %p599, %s596, 1
      %s601 = smul.addr %s598, 2
      %s602 = sadd.s32 %s600, %s601
      %s603 = smul.addr %s602, 4
      %s604 = scalar_lea.vmem %s4, %s603
      // Predicated region
      $region37: #{color_transform.1} parent=35 // pred_check
        %p605 = pneg %p138
      $region38: #{color_transform.1} parent=35 // pred_check_branch
        %607 = sbr.rel (%p605) target = $region40
      $region39: #{color_transform.1} parent=35 // pred_region
        %s608 = smul.u32 2, %s19
      $region40: #{color_transform.1} parent=35 // pred_fallthru
        _
    $region36: #{color_transform.1} parent=5 // pred_fallthru
      _
    %p609 = scmp.le.s32.totalorder 2, %s10
    // Predicated region
    $region41: #{color_transform.1} parent=5 // pred_check
      %p610 = pneg %p609
    $region42: #{color_transform.1} parent=5 // pred_check_branch
      %612 = sbr.rel (%p610) target = $region44
    $region43: #{color_transform.1} parent=5 // pred_region
      %s613 = ssub.s32 %s10, 2
      // Predicated region
      $region45: #{color_transform.1} parent=43 // pred_check
        %p614 = pneg %p144
      $region46: #{color_transform.1} parent=43 // pred_check_branch
        %616 = sbr.rel (%p614) target = $region48
      $region47: #{color_transform.1} parent=43 // pred_region
        %s617 = smul.u32 2, %s21
        %p618 = scmp.lt.s32.totalorder %s22, 1
        %s619 = scalar_select %p618, %s22, 1
        %p620 = scmp.lt.s32.totalorder %s617, 1
        %s621 = scalar_select %p620, %s617, 1
        %s622 = smul.addr %s619, 2
        %s623 = sadd.s32 %s621, %s622
        %s624 = smul.addr %s623, 4
        %s625 = scalar_lea.vmem %s4, %s624
      $region48: #{color_transform.1} parent=43 // pred_fallthru
        _
    $region44: #{color_transform.1} parent=5 // pred_fallthru
      _
  $region6: #{color_transform.1} parent=0 // loop_footer
    %s14 = sadd.s32 1, %s10
  $region7: #{color_transform.1} parent=0 // loop_footer_branch
    %9 = sbr.rel target = $region3
  $region8: #{color_transform.1} parent=0 // loop_exit
    _

</llo_original>
